<compile_context>
chip_gen: v7x
topology: tpu7x:2x2x1
jax: 0.10.0
libtpu: 0.0.40
codegen_flags: <defaults>
</compile_context>

<pallas_src>
import jax
import jax.numpy as jnp
import numpy as np
from jax.experimental import pallas as pl
from jax.experimental.pallas import tpu as pltpu

LEAKY_SLOPE = 0.01      # PyTorch nn.LeakyReLU default negative_slope
_LANE = 128             # TPU lane width


def _round_up(x, m):
    return ((x + m - 1) // m) * m


def _cdiv(a, b):
    return -(-a // b)


def _leaky_relu(x):
    # max(x, slope*x) == LeakyReLU(x) for 0 <= slope < 1 (mul+max, no compare+select).
    return jnp.maximum(x, LEAKY_SLOPE * x)


def _pad2d(x, rows, cols):
    r, c = x.shape
    return jnp.pad(x, ((0, rows - r), (0, cols - c)))


# ----------------------------------------------------------------------------
# Kernel
# ----------------------------------------------------------------------------
def critic_kernel(state_ref, action_ref,
                  w1_ref, b1_ref,
                  w2h_ref, w2a_ref, b2_ref,
                  w3_ref, b3_ref,
                  out_ref):
    # Layer 1: Linear(state_size -> h0) + LeakyReLU.
    # Cast streamed f32 state to bf16 in-kernel (free under the MXU); f32 accumulate.
    h1 = jnp.dot(state_ref[...].astype(jnp.bfloat16), w1_ref[...],
                 preferred_element_type=jnp.float32)
    h1 = _leaky_relu(h1 + b1_ref[...])

    # Layer 2: Linear(h0 + action_size -> h1) + LeakyReLU.
    # concat([h1, action]) @ W2 folded into two matmuls (exact).
    h2 = (jnp.dot(h1.astype(jnp.bfloat16), w2h_ref[...],
                  preferred_element_type=jnp.float32)
          + jnp.dot(action_ref[...].astype(jnp.bfloat16), w2a_ref[...],
                    preferred_element_type=jnp.float32))
    h2 = _leaky_relu(h2 + b2_ref[...])

    # Output layer: Linear(h1 -> 1). N=1 matmul wastes the MXU, so do it on the
    # VPU (elementwise mul) + XLU (lane reduction); b3 is an SMEM scalar.
    # (TB, 1) column output -> masked stores, accepted: output bytes are tiny.
    out_ref[...] = (jnp.sum(h2 * w3_ref[...], axis=-1, keepdims=True)
                    + b3_ref[0, 0])


# ----------------------------------------------------------------------------
# One-time parameter preparation (pad / split / cast ONCE, not per forward call)
# ----------------------------------------------------------------------------
def prepare_critic_params(params):
    """params: module-style (w1 (S,H0), b1 (H0,), w2 (H0+A,H1), b2 (H1,),
    w3 (H1,1), b3 (1,)).  Returns padded/cast tensors ready for critic_forward."""
    w1, b1, w2, b2, w3, b3 = params
    S, H0 = w1.shape
    H0A, H1 = w2.shape
    A = H0A - H0

    # Pad only the lane (output-feature) dims of the resident weights to 128;
    # the K dims stay at the true S / H0_p / A so streamed inputs need no padding.
    H0_p, H1_p = _round_up(H0, _LANE), _round_up(H1, _LANE)

    w1_p = _pad2d(w1, S, H0_p).astype(jnp.bfloat16)                # (S, H0_p)
    b1_p = _pad2d(b1.reshape(1, H0), 1, H0_p)                      # (1, H0_p) f32
    w2h_p = _pad2d(w2[:H0, :], H0_p, H1_p).astype(jnp.bfloat16)    # (H0_p, H1_p)
    w2a_p = _pad2d(w2[H0:, :], A, H1_p).astype(jnp.bfloat16)       # (A, H1_p)
    b2_p = _pad2d(b2.reshape(1, H1), 1, H1_p)                      # (1, H1_p) f32
    w3_row = _pad2d(w3.reshape(1, H1), 1, H1_p)                    # (1, H1_p) f32 (VPU)
    b3_s = b3.reshape(1, 1)                                        # SMEM scalar

    return (w1_p, b1_p, w2h_p, w2a_p, b2_p, w3_row, b3_s)


# ----------------------------------------------------------------------------
# Wrapper
# ----------------------------------------------------------------------------
def critic_forward(state, action, prepared, *, block_rows=1024, min_grid=None):
    """state: [B, state_size] f32, action: [B, action_size] f32,
    prepared: output of prepare_critic_params(). Returns [B, 1] float32."""
    w1_p, b1_p, w2h_p, w2a_p, b2_p, w3_row, b3_s = prepared

    B, S = state.shape
    A = action.shape[1]
    assert w1_p.shape[0] == S, "state_size mismatch with prepared params"
    assert w2a_p.shape[0] == A, "action_size mismatch with prepared params"
    H0_p = w1_p.shape[1]
    H1_p = w2h_p.shape[1]

    # Batch tiling: TB multiple of 16 (bf16 sublane packing), adaptive so batch
    # padding is at most one sublane group. min_grid=2 for mid/large batches so the
    # "parallel" batch axis can shard across both TensorCores on v7x (extra grid
    # step costs ~0.35us on single-TC chips - negligible).
    if min_grid is None:
        min_grid = 2 if B >= 256 else 1
    n_tiles = max(min_grid, _cdiv(B, block_rows))
    TB = _round_up(_cdiv(B, n_tiles), 16)
    B_p = _round_up(B, TB)
    grid = (B_p // TB,)

    # Only the batch dim is (possibly) padded; feature dims are streamed untouched.
    if B_p != B:
        state_in = jnp.pad(state, ((0, B_p - B), (0, 0)))
        action_in = jnp.pad(action, ((0, B_p - B), (0, 0)))
    else:
        state_in, action_in = state, action

    batch_tile = lambda i: (i, 0)
    resident = lambda i: (0, 0)   # same block every step -> DMA'd once, stays in VMEM

    cost = pl.CostEstimate(
        flops=2 * B_p * (S * H0_p + (H0_p + A) * H1_p + H1_p),
        transcendentals=0,
        bytes_accessed=(B_p * S * 4 + B_p * A * 4                       # streamed inputs
                        + (S * H0_p + H0_p * H1_p + A * H1_p) * 2       # bf16 weights
                        + (H0_p + 2 * H1_p + 1) * 4                     # biases / w3 row
                        + B_p * 4))                                     # output

    out = pl.pallas_call(
        critic_kernel,
        out_shape=jax.ShapeDtypeStruct((B_p, 1), jnp.float32),
        grid=grid,
        in_specs=[
            pl.BlockSpec((TB, S), batch_tile),         # state tile (full feature extent)
            pl.BlockSpec((TB, A), batch_tile),         # action tile (full feature extent)
            pl.BlockSpec((S, H0_p), resident),         # W1
            pl.BlockSpec((1, H0_p), resident),         # b1
            pl.BlockSpec((H0_p, H1_p), resident),      # W2 (hidden part)
            pl.BlockSpec((A, H1_p), resident),         # W2 (action part)
            pl.BlockSpec((1, H1_p), resident),         # b2
            pl.BlockSpec((1, H1_p), resident),         # W3 as a row (VPU)
            pl.BlockSpec(memory_space=pltpu.MemorySpace.SMEM),  # b3 scalar
        ],
        out_specs=pl.BlockSpec((TB, 1), batch_tile),
        compiler_params=pltpu.CompilerParams(
            dimension_semantics=("parallel",)),        # shard batch tiles across TCs (v7x)
        cost_estimate=cost,
    )(state_in, action_in, w1_p, b1_p, w2h_p, w2a_p, b2_p, w3_row, b3_s)

    return out[:B]


# ----------------------------------------------------------------------------
# Parameter init (mirrors the module's shapes / init scheme), module-style layout
# ----------------------------------------------------------------------------
def init_critic_params(key, state_size, action_size, hidden_units=(400, 300)):
    """fc_body uses PyTorch default Linear init (uniform +-1/sqrt(fan_in));
    critic_body layers use layer_init (uniform +-1/sqrt(weight.size(0)), bias=0),
    with w_scale=0.003 on the final layer."""
    h0, h1 = hidden_units[0], hidden_units[1]
    k1, k2, k3, kb1 = jax.random.split(key, 4)

    lim1 = 1.0 / np.sqrt(state_size)
    w1 = jax.random.uniform(k1, (state_size, h0), jnp.float32, -lim1, lim1)
    b1 = jax.random.uniform(kb1, (h0,), jnp.float32, -lim1, lim1)

    lim2 = 1.0 / np.sqrt(h1)   # layer_init: lim = 1/sqrt(weight.size(0)) = 1/sqrt(out)
    w2 = jax.random.uniform(k2, (h0 + action_size, h1), jnp.float32, -lim2, lim2)
    b2 = jnp.zeros((h1,), jnp.float32)

    lim3 = 1.0
    w3 = jax.random.uniform(k3, (h1, 1), jnp.float32, -lim3, lim3) * 0.003
    b3 = jnp.zeros((1,), jnp.float32)

    return (w1, b1, w2, b2, w3, b3)


# ----------------------------------------------------------------------------
# Pure-JAX reference (same bf16-operand / f32-accumulate math as the kernel)
# ----------------------------------------------------------------------------
def critic_ref(state, action, params):
    w1, b1, w2, b2, w3, b3 = params
    bf16, f32 = jnp.bfloat16, jnp.float32
    h1 = _leaky_relu(jnp.dot(state.astype(bf16), w1.astype(bf16),
                             preferred_element_type=f32) + b1)
    x = jnp.concatenate([h1.astype(bf16), action.astype(bf16)], axis=1)
    h2 = _leaky_relu(jnp.dot(x, w2.astype(bf16), preferred_element_type=f32) + b2)
    return jnp.dot(h2, w3, preferred_element_type=f32) + b3


if __name__ == "__main__":
    # Small, module-consistent shapes.
    batch, state_size, action_size = 8, 16, 4
    hidden_units = (32, 32)

    key = jax.random.PRNGKey(0)
    k_s, k_a, k_p = jax.random.split(key, 3)
    state = jax.random.normal(k_s, (batch, state_size), jnp.float32)
    action = jax.random.normal(k_a, (batch, action_size), jnp.float32)

    raw_params = init_critic_params(k_p, state_size, action_size, hidden_units)
    prepared = jax.tree_util.tree_map(jax.block_until_ready,
                                      prepare_critic_params(raw_params))  # one-time

    out = jax.block_until_ready(critic_forward(state, action, prepared))
    ref = critic_ref(state, action, raw_params)
    assert out.shape == (batch, 1), out.shape
    np.testing.assert_allclose(np.asarray(out), np.asarray(ref), rtol=1e-3, atol=1e-5)

    # Exercise multi-tile grid (megacore path), batch padding and resident weights:
    # B=40 with block_rows=16, min_grid=2 -> TB=16, B_p=48, grid=(3,).
    batch2 = 40
    k_s2, k_a2 = jax.random.split(jax.random.PRNGKey(1), 2)
    state2 = jax.random.normal(k_s2, (batch2, state_size), jnp.float32)
    action2 = jax.random.normal(k_a2, (batch2, action_size), jnp.float32)
    out2 = jax.block_until_ready(
        critic_forward(state2, action2, prepared, block_rows=16, min_grid=2))
    ref2 = critic_ref(state2, action2, raw_params)
    assert out2.shape == (batch2, 1), out2.shape
    np.testing.assert_allclose(np.asarray(out2), np.asarray(ref2), rtol=1e-3, atol=1e-5)

    print("KERNEL_OK")
</pallas_src>

<mosaic_0001>
module attributes {stable_mosaic.version = 11 : i64} {
  func.func @critic_kernel(%arg0: i32, %arg1: memref<16x16xf32, #tpu.memory_space<vmem>>, %arg2: memref<16x4xf32, #tpu.memory_space<vmem>>, %arg3: memref<16x128xbf16, #tpu.memory_space<vmem>>, %arg4: memref<1x128xf32, #tpu.memory_space<vmem>>, %arg5: memref<128x128xbf16, #tpu.memory_space<vmem>>, %arg6: memref<4x128xbf16, #tpu.memory_space<vmem>>, %arg7: memref<1x128xf32, #tpu.memory_space<vmem>>, %arg8: memref<1x128xf32, #tpu.memory_space<vmem>>, %arg9: memref<1x1xf32, #tpu.memory_space<smem>>, %arg10: memref<16x1xf32, #tpu.memory_space<vmem>>) attributes {dimension_semantics = [#tpu.dimension_semantics<parallel>], iteration_bounds = array<i64: 1>, scalar_prefetch = 0 : i64, scratch_operands = 0 : i64, tpu.core_type = #tpu.core_type<tc>, window_params = [{transform_indices = @transform_0, window_bounds = array<i64: 16, 16>}, {transform_indices = @transform_1, window_bounds = array<i64: 16, 4>}, {pipeline_mode = #tpu.pipeline_mode<synchronous>, transform_indices = @transform_2, window_bounds = array<i64: 16, 128>}, {pipeline_mode = #tpu.pipeline_mode<synchronous>, transform_indices = @transform_3, window_bounds = array<i64: 1, 128>}, {pipeline_mode = #tpu.pipeline_mode<synchronous>, transform_indices = @transform_4, window_bounds = array<i64: 128, 128>}, {pipeline_mode = #tpu.pipeline_mode<synchronous>, transform_indices = @transform_5, window_bounds = array<i64: 4, 128>}, {pipeline_mode = #tpu.pipeline_mode<synchronous>, transform_indices = @transform_6, window_bounds = array<i64: 1, 128>}, {pipeline_mode = #tpu.pipeline_mode<synchronous>, transform_indices = @transform_7, window_bounds = array<i64: 1, 128>}, {transform_indices = @transform_8, window_bounds = array<i64: 1, 1>}, {transform_indices = @transform_9, window_bounds = array<i64: 16, 1>}]} {
    %c0 = arith.constant 0 : index
    %c0_0 = arith.constant 0 : index
    %0 = vector.load %arg1[%c0, %c0_0] : memref<16x16xf32, #tpu.memory_space<vmem>>, vector<16x16xf32>
    %1 = arith.truncf %0 : vector<16x16xf32> to vector<16x16xbf16>
    %c0_1 = arith.constant 0 : index
    %c0_2 = arith.constant 0 : index
    %2 = vector.load %arg3[%c0_1, %c0_2] : memref<16x128xbf16, #tpu.memory_space<vmem>>, vector<16x128xbf16>
    %cst = arith.constant dense<0.000000e+00> : vector<16x128xf32>
    %3 = tpu.matmul %1, %2, %cst {dimension_numbers = #tpu.dot_dimension_numbers<[1], [0], [0], [1], [0, 0, 1, 1], [], []>} : vector<16x16xbf16>, vector<16x128xbf16>, vector<16x128xf32> -> vector<16x128xf32>
    %c0_3 = arith.constant 0 : index
    %c0_4 = arith.constant 0 : index
    %4 = vector.load %arg4[%c0_3, %c0_4] : memref<1x128xf32, #tpu.memory_space<vmem>>, vector<1x128xf32>
    %5 = vector.broadcast %4 : vector<1x128xf32> to vector<16x128xf32>
    %6 = arith.addf %3, %5 : vector<16x128xf32>
    %cst_5 = arith.constant 0.00999999977 : f32
    %7 = vector.broadcast %cst_5 : f32 to vector<16x128xf32>
    %8 = arith.mulf %7, %6 : vector<16x128xf32>
    %9 = arith.maximumf %6, %8 : vector<16x128xf32>
    %10 = arith.truncf %9 : vector<16x128xf32> to vector<16x128xbf16>
    %c0_6 = arith.constant 0 : index
    %c0_7 = arith.constant 0 : index
    %11 = vector.load %arg5[%c0_6, %c0_7] : memref<128x128xbf16, #tpu.memory_space<vmem>>, vector<128x128xbf16>
    %cst_8 = arith.constant dense<0.000000e+00> : vector<16x128xf32>
    %12 = tpu.matmul %10, %11, %cst_8 {dimension_numbers = #tpu.dot_dimension_numbers<[1], [0], [0], [1], [0, 0, 1, 1], [], []>} : vector<16x128xbf16>, vector<128x128xbf16>, vector<16x128xf32> -> vector<16x128xf32>
    %c0_9 = arith.constant 0 : index
    %c0_10 = arith.constant 0 : index
    %13 = vector.load %arg2[%c0_9, %c0_10] : memref<16x4xf32, #tpu.memory_space<vmem>>, vector<16x4xf32>
    %14 = arith.truncf %13 : vector<16x4xf32> to vector<16x4xbf16>
    %c0_11 = arith.constant 0 : index
    %c0_12 = arith.constant 0 : index
    %15 = vector.load %arg6[%c0_11, %c0_12] : memref<4x128xbf16, #tpu.memory_space<vmem>>, vector<4x128xbf16>
    %cst_13 = arith.constant dense<0.000000e+00> : vector<16x128xf32>
    %16 = tpu.matmul %14, %15, %cst_13 {dimension_numbers = #tpu.dot_dimension_numbers<[1], [0], [0], [1], [0, 0, 1, 1], [], []>} : vector<16x4xbf16>, vector<4x128xbf16>, vector<16x128xf32> -> vector<16x128xf32>
    %17 = arith.addf %12, %16 : vector<16x128xf32>
    %c0_14 = arith.constant 0 : index
    %c0_15 = arith.constant 0 : index
    %18 = vector.load %arg7[%c0_14, %c0_15] : memref<1x128xf32, #tpu.memory_space<vmem>>, vector<1x128xf32>
    %19 = vector.broadcast %18 : vector<1x128xf32> to vector<16x128xf32>
    %20 = arith.addf %17, %19 : vector<16x128xf32>
    %cst_16 = arith.constant 0.00999999977 : f32
    %21 = vector.broadcast %cst_16 : f32 to vector<16x128xf32>
    %22 = arith.mulf %21, %20 : vector<16x128xf32>
    %23 = arith.maximumf %20, %22 : vector<16x128xf32>
    %c0_17 = arith.constant 0 : index
    %c0_18 = arith.constant 0 : index
    %24 = vector.load %arg8[%c0_17, %c0_18] : memref<1x128xf32, #tpu.memory_space<vmem>>, vector<1x128xf32>
    %25 = vector.broadcast %24 : vector<1x128xf32> to vector<16x128xf32>
    %26 = arith.mulf %23, %25 : vector<16x128xf32>
    %cst_19 = arith.constant dense<0.000000e+00> : vector<16xf32>
    %27 = vector.multi_reduction <add>, %26, %cst_19 [1] : vector<16x128xf32> to vector<16xf32>
    %28 = vector.shape_cast %27 : vector<16xf32> to vector<16x1xf32>
    %c0_20 = arith.constant 0 : index
    %c0_21 = arith.constant 0 : index
    %29 = memref.load %arg9[%c0_20, %c0_21] : memref<1x1xf32, #tpu.memory_space<smem>>
    %30 = vector.broadcast %29 : f32 to vector<16x1xf32>
    %31 = arith.addf %28, %30 : vector<16x1xf32>
    %c0_22 = arith.constant 0 : index
    %c0_23 = arith.constant 0 : index
    %32 = vector.load %arg10[%c0_22, %c0_23] : memref<16x1xf32, #tpu.memory_space<vmem>>, vector<16x1xf32>
    tpu.vector_store %arg10[%c0_22, %c0_23], %31 {strides = array<i32>} : memref<16x1xf32, #tpu.memory_space<vmem>>, vector<16x1xf32>,
    return
  }
  func.func @transform_0(%arg0: i32) -> (i32, i32) {
    %c0_i32 = arith.constant 0 : i32
    %c0_i32_0 = arith.constant 0 : i32
    return %arg0, %c0_i32 : i32, i32
  }
  func.func @transform_1(%arg0: i32) -> (i32, i32) {
    %c0_i32 = arith.constant 0 : i32
    %c0_i32_0 = arith.constant 0 : i32
    return %arg0, %c0_i32 : i32, i32
  }
  func.func @transform_2(%arg0: i32) -> (i32, i32) {
    %c0_i32 = arith.constant 0 : i32
    %c0_i32_0 = arith.constant 0 : i32
    %c0_i32_1 = arith.constant 0 : i32
    return %c0_i32, %c0_i32_0 : i32, i32
  }
  func.func @transform_3(%arg0: i32) -> (i32, i32) {
    %c0_i32 = arith.constant 0 : i32
    %c0_i32_0 = arith.constant 0 : i32
    %c0_i32_1 = arith.constant 0 : i32
    return %c0_i32, %c0_i32_0 : i32, i32
  }
  func.func @transform_4(%arg0: i32) -> (i32, i32) {
    %c0_i32 = arith.constant 0 : i32
    %c0_i32_0 = arith.constant 0 : i32
    %c0_i32_1 = arith.constant 0 : i32
    return %c0_i32, %c0_i32_0 : i32, i32
  }
  func.func @transform_5(%arg0: i32) -> (i32, i32) {
    %c0_i32 = arith.constant 0 : i32
    %c0_i32_0 = arith.constant 0 : i32
    %c0_i32_1 = arith.constant 0 : i32
    return %c0_i32, %c0_i32_0 : i32, i32
  }
  func.func @transform_6(%arg0: i32) -> (i32, i32) {
    %c0_i32 = arith.constant 0 : i32
    %c0_i32_0 = arith.constant 0 : i32
    %c0_i32_1 = arith.constant 0 : i32
    return %c0_i32, %c0_i32_0 : i32, i32
  }
  func.func @transform_7(%arg0: i32) -> (i32, i32) {
    %c0_i32 = arith.constant 0 : i32
    %c0_i32_0 = arith.constant 0 : i32
    %c0_i32_1 = arith.constant 0 : i32
    return %c0_i32, %c0_i32_0 : i32, i32
  }
  func.func @transform_8(%arg0: i32) -> (i32, i32) {
    %c0_i32 = arith.constant 0 : i32
    %c0_i32_0 = arith.constant 0 : i32
    %c0_i32_1 = arith.constant 0 : i32
    return %c0_i32, %c0_i32_0 : i32, i32
  }
  func.func @transform_9(%arg0: i32) -> (i32, i32) {
    %c0_i32 = arith.constant 0 : i32
    %c0_i32_0 = arith.constant 0 : i32
    return %arg0, %c0_i32 : i32, i32
  }
}

</mosaic_0001>

<llo_original>
// kernel: tpu_custom_call.1
$region0: #{tpu_custom_call.1}
  #allocation0 [shape = 'u32[]', space=smem, size = 0x4, offset = 0x4, fixed_abs, tag = 'smem constant byte address 0x4 - core index']
  #allocation1 [shape = 'u32[144,128]{1,0:T(1,128)}', space=vmem, size = 0x12000, scoped, tag = 'internal scratch']
  #allocation2 [shape = 'f32[1,1]{1,0:T(1,128)S(6)}', space=smem, size = 0x200, scoped, tag = 'scoped memory for tpu_custom_call.1']
  %s0 = inlined_call_operand.vmem [shape: f32[16,16], index: 0, kind: input, shape index: {}]
  %s1 = inlined_call_operand.vmem [shape: f32[16,4], index: 1, kind: input, shape index: {}]
  %s2 = inlined_call_operand.vmem [shape: bf16[16,128], index: 2, kind: input, shape index: {}]
  %s3 = inlined_call_operand.vmem [shape: f32[1,128], index: 3, kind: input, shape index: {}]
  %s4 = inlined_call_operand.hbm [shape: bf16[128,128], index: 4, kind: input, shape index: {}]
  %s5 = inlined_call_operand.vmem [shape: bf16[4,128], index: 5, kind: input, shape index: {}]
  %s6 = inlined_call_operand.vmem [shape: f32[1,128], index: 6, kind: input, shape index: {}]
  %s7 = inlined_call_operand.vmem [shape: f32[1,128], index: 7, kind: input, shape index: {}]
  %s8 = inlined_call_operand.<no memory space> [shape: f32[1,1], index: 8, kind: input, shape index: {}]
  %s9 = inlined_call_operand.vmem [shape: f32[16,1], index: 9, kind: output, shape index: {}]
  %s10 = sld [smem:[#allocation0]]
  $region50: #{tpu_custom_call.1} parent=0
    _
  %s12 = ssub.s32 1, %s10
  %s13 = scalar_select 0, %s12, %s10
  %14 = sst [smem:[#allocation2]] %s8
  $region1: #{tpu_custom_call.1} parent=0
    #allocation3 [shape = 'u8[32768]{0}', space=vmem, size = 0x8000, scoped, tag = 'input window, operand 4, single buffered']
    #allocation4 [shape = 's32[1]{0}', space=sflag, size = 0x4, scoped, tag = 'scoped memory for tpu_custom_call.1']
    %15 = vsyncpa [#allocation4], 0
    // Predicated region
    $region2: #{tpu_custom_call.1} parent=1 // pred_check
      _
    $region3: #{tpu_custom_call.1} parent=1 // pred_check_branch
      %17 = sbr.rel (0) target = $region5
    $region4: #{tpu_custom_call.1} parent=1 // pred_region
      _
    $region5: #{tpu_custom_call.1} parent=1 // pred_fallthru
      _
    // Predicated region
    $region6: #{tpu_custom_call.1} parent=1 // pred_check
      _
    $region7: #{tpu_custom_call.1} parent=1 // pred_check_branch
      %19 = sbr.rel (0) target = $region9
    $region8: #{tpu_custom_call.1} parent=1 // pred_region
      _
    $region9: #{tpu_custom_call.1} parent=1 // pred_fallthru
      _
    // Predicated region
    $region10: #{tpu_custom_call.1} parent=1 // pred_check
      _
    $region11: #{tpu_custom_call.1} parent=1 // pred_check_branch
      %21 = sbr.rel (0) target = $region13
    $region12: #{tpu_custom_call.1} parent=1 // pred_region
      _
    $region13: #{tpu_custom_call.1} parent=1 // pred_fallthru
      _
    // Predicated region
    $region14: #{tpu_custom_call.1} parent=1 // pred_check
      _
    $region15: #{tpu_custom_call.1} parent=1 // pred_check_branch
      %23 = sbr.rel (0) target = $region17
    $region16: #{tpu_custom_call.1} parent=1 // pred_region
      _
    $region17: #{tpu_custom_call.1} parent=1 // pred_fallthru
      _
    // Predicated region
    $region18: #{tpu_custom_call.1} parent=1 // pred_check
      _
    $region19: #{tpu_custom_call.1} parent=1 // pred_check_branch
      %25 = sbr.rel (0) target = $region21
    $region20: #{tpu_custom_call.1} parent=1 // pred_region
      %s27 = ssub.s32 1024, 1024
      %28 = vsyncadd [#allocation4], %s27
      %s29 = sshll.u32 [#allocation3], 4
      %s30 = int_to_ptr.vmem [resolvable:$true] %s29
      %35 = dma.hbm_to_vmem [thread:$0]  %s4, 1024, %s30, [#allocation4], 64, 64, 4
    $region21: #{tpu_custom_call.1} parent=1 // pred_fallthru
      _
    // Predicated region
    $region22: #{tpu_custom_call.1} parent=1 // pred_check
      _
    $region23: #{tpu_custom_call.1} parent=1 // pred_check_branch
      %37 = sbr.rel (0) target = $region25
    $region24: #{tpu_custom_call.1} parent=1 // pred_region
      _
    $region25: #{tpu_custom_call.1} parent=1 // pred_fallthru
      _
    // Predicated region
    $region26: #{tpu_custom_call.1} parent=1 // pred_check
      _
    $region27: #{tpu_custom_call.1} parent=1 // pred_check_branch
      %39 = sbr.rel (0) target = $region29
    $region28: #{tpu_custom_call.1} parent=1 // pred_region
      _
    $region29: #{tpu_custom_call.1} parent=1 // pred_fallthru
      _
    // Predicated region
    $region30: #{tpu_custom_call.1} parent=1 // pred_check
      _
    $region31: #{tpu_custom_call.1} parent=1 // pred_check_branch
      %41 = sbr.rel (0) target = $region33
    $region32: #{tpu_custom_call.1} parent=1 // pred_region
      _
    $region33: #{tpu_custom_call.1} parent=1 // pred_fallthru
      _
    // Predicated region
    $region34: #{tpu_custom_call.1} parent=1 // pred_check
      _
    $region35: #{tpu_custom_call.1} parent=1 // pred_check_branch
      %43 = sbr.rel (0) target = $region37
    $region36: #{tpu_custom_call.1} parent=1 // pred_region
      _
    $region37: #{tpu_custom_call.1} parent=1 // pred_fallthru
      _
    // Predicated region
    $region38: #{tpu_custom_call.1} parent=1 // pred_check
      _
    $region39: #{tpu_custom_call.1} parent=1 // pred_check_branch
      %45 = sbr.rel (0) target = $region41
    $region40: #{tpu_custom_call.1} parent=1 // pred_region
      %46 = dma.done [#allocation4], 1024
    $region41: #{tpu_custom_call.1} parent=1 // pred_fallthru
      _
    %v48 = vld [vmem:[%s0] sm:$0xff]
    %v49 = vld [vmem:[%s0 + $0x8] sm:$0xff]
    %v50 = vpack.c.bf16 %v49, %v48
    %v51 = vld [vmem:[%s2] sm:$0xf]
    %v52 = vld [vmem:[%s2 + $0x4] sm:$0xf]
    %v53 = vld [vmem:[%s3] sm:$0x1]
    %v55 = vlaneseq
    %v56 = vshrl.u32 %v55, 7
    %v57 = vsub.s32 0, %v56
    %v58 = vrot.slane %v53, %v57
    %v62 = vunpack.c.l.b16 %v51
    %v63 = vunpack.c.l.b16 %v52
    %v64 = vpack.c.b16 %v63, %v62
    %vm66 = vcmask 130048
    %v68 = vsel %vm66, %v50, 0
    %70 = vmatprep.subr.bf16.mxu0 0
    %71 = vmatpush1.bf16.msra.mxu0 %v64
    %72 = vmatprep.subr.bf16.mxu0 0
    %73 = vmatpush1.bf16.msra.mxu0 0
    %74 = vmatprep.subr.bf16.mxu0 0
    %75 = vmatpush1.bf16.msra.mxu0 0
    %76 = vmatprep.subr.bf16.mxu0 0
    %77 = vmatpush1.bf16.msra.mxu0 0
    %78 = vmatprep.subr.bf16.mxu0 0
    %79 = vmatpush1.bf16.msra.mxu0 0
    %80 = vmatprep.subr.bf16.mxu0 0
    %81 = vmatpush1.bf16.msra.mxu0 0
    %82 = vmatprep.subr.bf16.mxu0 0
    %83 = vmatpush1.bf16.msra.mxu0 0
    %84 = vmatprep.subr.bf16.mxu0 0
    %85 = vmatpush1.bf16.msra.mxu0 0
    %86 = vmatprep.subr.bf16.mxu0 0
    %87 = vmatpush1.bf16.msra.mxu0 0
    %88 = vmatprep.subr.bf16.mxu0 0
    %89 = vmatpush1.bf16.msra.mxu0 0
    %90 = vmatprep.subr.bf16.mxu0 0
    %91 = vmatpush1.bf16.msra.mxu0 0
    %92 = vmatprep.subr.bf16.mxu0 0
    %93 = vmatpush1.bf16.msra.mxu0 0
    %94 = vmatprep.subr.bf16.mxu0 0
    %95 = vmatpush1.bf16.msra.mxu0 0
    %96 = vmatprep.subr.bf16.mxu0 0
    %97 = vmatpush1.bf16.msra.mxu0 0
    %98 = vmatprep.subr.bf16.mxu0 0
    %99 = vmatpush1.bf16.msra.mxu0 0
    %100 = vmatprep.subr.bf16.mxu0 0
    %101 = vmatpush1.bf16.msra.mxu0 0
    %102 = vmatprep.mubr.bf16.mxu0 0
    %103 = vmatmul.mubr.bf16.gmra.mrb[0].mxu0 %v68
    %v104 = vpop.f32.mrb[0].mxu0
    %v105 = vadd.f32 %v58, %v104
    %v106 = vpop.f32.mrb[0].mxu0
    %v107 = vpop.f32.mrb[0].mxu0
    %v108 = vadd.f32 %v58, %v107
    %v109 = vpop.f32.mrb[0].mxu0
    %110 = vdwg.mxu0
    %v111 = vmul.f32 %v105, 0.01
    %v112 = vmul.f32 %v108, 0.01
    %v113 = vmax.f32 %v105, %v111
    %v114 = vmax.f32 %v108, %v112
    %v115 = vpack.c.bf16 %v114, %v113
    %v116 = vld [vmem:[#allocation3] sm:$0xf]
    %v117 = vld [vmem:[#allocation3 + $0x4] sm:$0xf]
    %v118 = vld [vmem:[#allocation3 + $0x8] sm:$0xf]
    %v119 = vld [vmem:[#allocation3 + $0xc] sm:$0xf]
    %v120 = vld [vmem:[#allocation3 + $0x10] sm:$0xf]
    %v121 = vld [vmem:[#allocation3 + $0x14] sm:$0xf]
    %v122 = vld [vmem:[#allocation3 + $0x18] sm:$0xf]
    %v123 = vld [vmem:[#allocation3 + $0x1c] sm:$0xf]
    %v124 = vld [vmem:[#allocation3 + $0x20] sm:$0xf]
    %v125 = vld [vmem:[#allocation3 + $0x24] sm:$0xf]
    %v126 = vld [vmem:[#allocation3 + $0x28] sm:$0xf]
    %v127 = vld [vmem:[#allocation3 + $0x2c] sm:$0xf]
    %v128 = vld [vmem:[#allocation3 + $0x30] sm:$0xf]
    %v129 = vld [vmem:[#allocation3 + $0x34] sm:$0xf]
    %v130 = vld [vmem:[#allocation3 + $0x38] sm:$0xf]
    %v131 = vld [vmem:[#allocation3 + $0x3c] sm:$0xf]
    %v132 = vld [vmem:[%s1] sm:$0xff]
    %v133 = vld [vmem:[%s1 + $0x8] sm:$0xff]
    %v134 = vpack.c.bf16 %v133, %v132
    %v135 = vld [vmem:[%s5] sm:$0x3]
    %vm136 = vcmask 31744
    %v138 = vsel %vm136, %v134, 0
    %vm140 = vcmask 1041408
    %v142 = vsel %vm140, %v135, 0
    %144 = vmatprep.subr.bf16.mxu0 0
    %145 = vmatpush1.bf16.msra.mxu0 %v142
    %146 = vmatprep.subr.bf16.mxu0 0
    %147 = vmatpush1.bf16.msra.mxu0 0
    %148 = vmatprep.subr.bf16.mxu0 0
    %149 = vmatpush1.bf16.msra.mxu0 0
    %150 = vmatprep.subr.bf16.mxu0 0
    %151 = vmatpush1.bf16.msra.mxu0 0
    %152 = vmatprep.subr.bf16.mxu0 0
    %153 = vmatpush1.bf16.msra.mxu0 0
    %154 = vmatprep.subr.bf16.mxu0 0
    %155 = vmatpush1.bf16.msra.mxu0 0
    %156 = vmatprep.subr.bf16.mxu0 0
    %157 = vmatpush1.bf16.msra.mxu0 0
    %158 = vmatprep.subr.bf16.mxu0 0
    %159 = vmatpush1.bf16.msra.mxu0 0
    %160 = vmatprep.subr.bf16.mxu0 0
    %161 = vmatpush1.bf16.msra.mxu0 0
    %162 = vmatprep.subr.bf16.mxu0 0
    %163 = vmatpush1.bf16.msra.mxu0 0
    %164 = vmatprep.subr.bf16.mxu0 0
    %165 = vmatpush1.bf16.msra.mxu0 0
    %166 = vmatprep.subr.bf16.mxu0 0
    %167 = vmatpush1.bf16.msra.mxu0 0
    %168 = vmatprep.subr.bf16.mxu0 0
    %169 = vmatpush1.bf16.msra.mxu0 0
    %170 = vmatprep.subr.bf16.mxu0 0
    %171 = vmatpush1.bf16.msra.mxu0 0
    %172 = vmatprep.subr.bf16.mxu0 0
    %173 = vmatpush1.bf16.msra.mxu0 0
    %174 = vmatprep.subr.bf16.mxu0 0
    %175 = vmatpush1.bf16.msra.mxu0 0
    %176 = vmatprep.mubr.bf16.mxu0 0
    %177 = vmatmul.mubr.bf16.gmra.mrb[0].mxu0 %v138
    %v178 = vpop.f32.mrb[0].mxu0
    %v179 = vadd.f32 0.0, %v178
    %v180 = vpop.f32.mrb[0].mxu0
    %v181 = vpop.f32.mrb[0].mxu0
    %v182 = vadd.f32 0.0, %v181
    %v183 = vpop.f32.mrb[0].mxu0
    %184 = vdwg.mxu0
    %v201 = vunpack.c.l.b16 %v116
    %v202 = vunpack.c.l.b16 %v117
    %v203 = vunpack.c.l.b16 %v118
    %v204 = vunpack.c.l.b16 %v119
    %v205 = vunpack.c.l.b16 %v120
    %v206 = vunpack.c.l.b16 %v121
    %v207 = vunpack.c.l.b16 %v122
    %v208 = vunpack.c.l.b16 %v123
    %v209 = vunpack.c.l.b16 %v124
    %v210 = vunpack.c.l.b16 %v125
    %v211 = vunpack.c.l.b16 %v126
    %v212 = vunpack.c.l.b16 %v127
    %v213 = vunpack.c.l.b16 %v128
    %v214 = vunpack.c.l.b16 %v129
    %v215 = vunpack.c.l.b16 %v130
    %v216 = vunpack.c.l.b16 %v131
    %v217 = vpack.c.b16 %v202, %v201
    %v218 = vpack.c.b16 %v204, %v203
    %v219 = vpack.c.b16 %v206, %v205
    %v220 = vpack.c.b16 %v208, %v207
    %v221 = vpack.c.b16 %v210, %v209
    %v222 = vpack.c.b16 %v212, %v211
    %v223 = vpack.c.b16 %v214, %v213
    %v224 = vpack.c.b16 %v216, %v215
    %233 = vmatprep.subr.bf16.mxu0 0
    %234 = vmatpush1.bf16.msra.mxu0 %v217
    %235 = vmatprep.subr.bf16.mxu0 0
    %236 = vmatpush1.bf16.msra.mxu0 %v218
    %237 = vmatprep.subr.bf16.mxu0 0
    %238 = vmatpush1.bf16.msra.mxu0 %v219
    %239 = vmatprep.subr.bf16.mxu0 0
    %240 = vmatpush1.bf16.msra.mxu0 %v220
    %241 = vmatprep.subr.bf16.mxu0 0
    %242 = vmatpush1.bf16.msra.mxu0 %v221
    %243 = vmatprep.subr.bf16.mxu0 0
    %244 = vmatpush1.bf16.msra.mxu0 %v222
    %245 = vmatprep.subr.bf16.mxu0 0
    %246 = vmatpush1.bf16.msra.mxu0 %v223
    %247 = vmatprep.subr.bf16.mxu0 0
    %248 = vmatpush1.bf16.msra.mxu0 %v224
    %249 = vmatprep.subr.bf16.mxu0 0
    %250 = vmatpush1.bf16.msra.mxu0 0
    %251 = vmatprep.subr.bf16.mxu0 0
    %252 = vmatpush1.bf16.msra.mxu0 0
    %253 = vmatprep.subr.bf16.mxu0 0
    %254 = vmatpush1.bf16.msra.mxu0 0
    %255 = vmatprep.subr.bf16.mxu0 0
    %256 = vmatpush1.bf16.msra.mxu0 0
    %257 = vmatprep.subr.bf16.mxu0 0
    %258 = vmatpush1.bf16.msra.mxu0 0
    %259 = vmatprep.subr.bf16.mxu0 0
    %260 = vmatpush1.bf16.msra.mxu0 0
    %261 = vmatprep.subr.bf16.mxu0 0
    %262 = vmatpush1.bf16.msra.mxu0 0
    %263 = vmatprep.subr.bf16.mxu0 0
    %264 = vmatpush1.bf16.msra.mxu0 0
    %265 = vmatprep.mubr.bf16.mxu0 0
    %266 = vmatmul.mubr.bf16.gmra.mrb[0].mxu0 %v115
    %v267 = vpop.f32.mrb[0].mxu0
    %v268 = vadd.f32 %v179, %v267
    %v269 = vpop.f32.mrb[0].mxu0
    %v270 = vpop.f32.mrb[0].mxu0
    %v271 = vadd.f32 %v182, %v270
    %v272 = vpop.f32.mrb[0].mxu0
    %273 = vdwg.mxu0
    %v274 = vld [vmem:[%s6] sm:$0x1]
    %v276 = vlaneseq
    %v277 = vshrl.u32 %v276, 7
    %v278 = vsub.s32 0, %v277
    %v279 = vrot.slane %v274, %v278
    %v281 = vadd.f32 %v268, %v279
    %v282 = vadd.f32 %v271, %v279
    %v283 = vmul.f32 %v281, 0.01
    %v284 = vmul.f32 %v282, 0.01
    %v285 = vmax.f32 %v281, %v283
    %v286 = vmax.f32 %v282, %v284
    %v287 = vld [vmem:[%s7] sm:$0x1]
    %v289 = vlaneseq
    %v290 = vshrl.u32 %v289, 7
    %v291 = vsub.s32 0, %v290
    %v292 = vrot.slane %v287, %v291
    %v294 = vmul.f32 %v285, %v292
    %v295 = vmul.f32 %v286, %v292
    %296 = vadd.xlane.f32.xlu0 %v294
    %v297 = vpop.xlane.xlu0 %296
    %298 = vadd.xlane.f32.xlu0 %v295
    %v299 = vpop.xlane.xlu0 %298
    %s300 = sld [smem:[#allocation2]]
    %v301 = vstv %s300
    %v302 = vadd.f32 %v297, %v301
    %v303 = vadd.f32 %v299, %v301
    %vm304 = vcmask 7168
    %305 = vst.msk [vmem:[%s9] sm:$0xff] %vm304, %v302
    %306 = vst.msk [vmem:[%s9 + $0x8] sm:$0xff] %vm304, %v303
    // Predicated region
    $region42: #{tpu_custom_call.1} parent=1 // pred_check
      _
    $region43: #{tpu_custom_call.1} parent=1 // pred_check_branch
      %308 = sbr.rel (0) target = $region45
    $region44: #{tpu_custom_call.1} parent=1 // pred_region
      _
    $region45: #{tpu_custom_call.1} parent=1 // pred_fallthru
      _
    // Predicated region
    $region46: #{tpu_custom_call.1} parent=1 // pred_check
      _
    $region47: #{tpu_custom_call.1} parent=1 // pred_check_branch
      %310 = sbr.rel (0) target = $region49
    $region48: #{tpu_custom_call.1} parent=1 // pred_region
      _
    $region49: #{tpu_custom_call.1} parent=1 // pred_fallthru
      _
    %311 = vsyncpa [#allocation4], 1

</llo_original>
